<compile_context>
chip_gen: v6e
topology: v6e:2x2x1
jax: 0.10.0
libtpu: 0.0.40
codegen_flags: <defaults>
</compile_context>

<pallas_src>
import functools

import jax
import jax.numpy as jnp
from jax.experimental import pallas as pl
from jax.experimental.pallas import tpu as pltpu


def _contrastive_loss_kernel(x_ref, o_ref, acc_ref, *, n_rows, tile_rows):
    i = pl.program_id(0)

    @pl.when(i == 0)
    def _init():
        acc_ref[...] = jnp.zeros_like(acc_ref)

    # (TN, C) logits tile; accumulate in f32 regardless of input dtype.
    x = x_ref[...].astype(jnp.float32)

    # Numerically stable log-sum-exp along the class (lane) axis.
    m = jnp.max(x, axis=-1, keepdims=True)                               # (TN, 1)
    lse = jnp.log(jnp.sum(jnp.exp(x - m), axis=-1, keepdims=True)) + m   # (TN, 1)

    # Target class is always 0 -> per-row CE = logsumexp - logit[:, 0].
    per_row = lse - x[:, 0:1]                                            # (TN, 1)

    # Mask padded rows of a ragged last tile (trace-time check: no mask code
    # is emitted when N is a multiple of the tile).
    if n_rows % tile_rows != 0:
        row_ids = i * tile_rows + jax.lax.broadcasted_iota(
            jnp.int32, (tile_rows, 1), 0)
        per_row = jnp.where(row_ids < n_rows, per_row, 0.0)

    # Running SUM across grid steps (not a per-tile mean).
    acc_ref[...] += jnp.sum(per_row).reshape(1, 1)

    @pl.when(i == pl.num_programs(0) - 1)
    def _finalize():
        # reduction='mean': single scale by 1/N at the very end.
        o_ref[...] = acc_ref[...] * (1.0 / n_rows)


def _choose_row_tile(n, c, itemsize):
    """Largest row tile (multiple of 8) targeting ~4 MiB per pipelined slot."""
    target_bytes = 4 * 1024 * 1024
    rows = target_bytes // max(1, c * itemsize)
    rows = max(8, (rows // 8) * 8)
    if rows >= n:
        return n  # single full-extent block is always layout-legal
    return int(rows)


def contrastive_loss(inputs, reduction="mean", tile_rows=None):
    """Pallas implementation of ContrastiveLoss.forward (reduction='mean')."""
    assert reduction == "mean", "only reduction='mean' implemented"
    n, c = inputs.shape
    itemsize = jnp.dtype(inputs.dtype).itemsize

    if tile_rows is None:
        tile_rows = _choose_row_tile(n, c, itemsize)
    tile_rows = int(min(tile_rows, n))
    grid = (pl.cdiv(n, tile_rows),)

    kernel = functools.partial(
        _contrastive_loss_kernel, n_rows=n, tile_rows=tile_rows)

    out = pl.pallas_call(
        kernel,
        out_shape=jax.ShapeDtypeStruct((1, 1), jnp.float32),
        grid_spec=pltpu.PrefetchScalarGridSpec(
            num_scalar_prefetch=0,
            grid=grid,
            in_specs=[pl.BlockSpec((tile_rows, c), lambda i: (i, 0))],
            out_specs=pl.BlockSpec((1, 1), lambda i: (0, 0)),
            scratch_shapes=[pltpu.VMEM((1, 1), jnp.float32)],
        ),
        compiler_params=pltpu.CompilerParams(
            dimension_semantics=("arbitrary",),
        ),
        cost_estimate=pl.CostEstimate(
            flops=5 * n * c,
            transcendentals=n * c + n,
            bytes_accessed=n * c * itemsize + 4,
        ),
    )(inputs)
    return out[0, 0]


def _reference_loss(inputs):
    # Plain-JAX reference (cross entropy vs class-0 targets, mean reduction).
    x = inputs.astype(jnp.float32)
    lse = jax.scipy.special.logsumexp(x, axis=-1)
    return jnp.mean(lse - x[:, 0])


if __name__ == "__main__":
    key = jax.random.PRNGKey(0)

    # Case 1: small single-block case (batch=8 rows, 32 "classes":
    # 1 positive + 31 negative similarities), f32.
    x1 = jax.random.normal(key, (8, 32), dtype=jnp.float32)
    loss1 = contrastive_loss(x1)
    jax.block_until_ready(loss1)
    ref1 = _reference_loss(x1)
    assert jnp.allclose(loss1, ref1, rtol=1e-5, atol=1e-5), (loss1, ref1)

    # Case 2: exercises the streaming multi-tile path with a ragged last tile
    # (20 rows, tile of 8 -> grid of 3, last tile masked) and bf16 HBM input.
    x2 = jax.random.normal(jax.random.PRNGKey(1), (20, 32), dtype=jnp.bfloat16)
    loss2 = contrastive_loss(x2, tile_rows=8)
    jax.block_until_ready(loss2)
    ref2 = _reference_loss(x2)
    assert jnp.allclose(loss2, ref2, rtol=1e-4, atol=1e-4), (loss2, ref2)

    print("KERNEL_OK")
</pallas_src>

<mosaic_0001>
module attributes {stable_mosaic.version = 11 : i64} {
  func.func @_contrastive_loss_kernel(%arg0: i32, %arg1: memref<8x32xf32, #tpu.memory_space<vmem>>, %arg2: memref<1x1xf32, #tpu.memory_space<vmem>>, %arg3: memref<1x1xf32, #tpu.memory_space<vmem>>) attributes {dimension_semantics = [#tpu.dimension_semantics<arbitrary>], iteration_bounds = array<i64: 1>, scalar_prefetch = 0 : i64, scratch_operands = 1 : i64, tpu.core_type = #tpu.core_type<tc>, window_params = [{transform_indices = @transform_0, window_bounds = array<i64: 8, 32>}, {pipeline_mode = #tpu.pipeline_mode<synchronous>, transform_indices = @transform_1, window_bounds = array<i64: 1, 1>}]} {
    %c0_i32 = arith.constant 0 : i32
    %0 = arith.cmpi eq, %arg0, %c0_i32 : i32
    %1 = arith.extui %0 : i1 to i32
    %c0_i32_0 = arith.constant 0 : i32
    %2 = arith.cmpi ne, %1, %c0_i32_0 : i32
    scf.if %2 {
      %cst_10 = arith.constant 0.000000e+00 : f32
      %26 = vector.broadcast %cst_10 : f32 to vector<1x1xf32>
      %c0_11 = arith.constant 0 : index
      %c0_12 = arith.constant 0 : index
      %27 = vector.load %arg3[%c0_11, %c0_12] : memref<1x1xf32, #tpu.memory_space<vmem>>, vector<1x1xf32>
      tpu.vector_store %arg3[%c0_11, %c0_12], %26 {strides = array<i32>} : memref<1x1xf32, #tpu.memory_space<vmem>>, vector<1x1xf32>,
    } else {
    }
    %c0 = arith.constant 0 : index
    %c0_1 = arith.constant 0 : index
    %3 = vector.load %arg1[%c0, %c0_1] : memref<8x32xf32, #tpu.memory_space<vmem>>, vector<8x32xf32>
    %cst = arith.constant dense<0xFF800000> : vector<8xf32>
    %4 = vector.multi_reduction <maximumf>, %3, %cst [1] : vector<8x32xf32> to vector<8xf32>
    %5 = vector.shape_cast %4 : vector<8xf32> to vector<8x1xf32>
    %6 = vector.broadcast %5 : vector<8x1xf32> to vector<8x32xf32>
    %7 = arith.subf %3, %6 : vector<8x32xf32>
    %8 = math.exp %7 : vector<8x32xf32>
    %cst_2 = arith.constant dense<0.000000e+00> : vector<8xf32>
    %9 = vector.multi_reduction <add>, %8, %cst_2 [1] : vector<8x32xf32> to vector<8xf32>
    %10 = vector.shape_cast %9 : vector<8xf32> to vector<8x1xf32>
    %11 = math.log %10 : vector<8x1xf32>
    %12 = arith.addf %11, %5 : vector<8x1xf32>
    %13 = vector.extract_strided_slice %3 {offsets = [0, 0], sizes = [8, 1], strides = [1, 1]} : vector<8x32xf32> to vector<8x1xf32>
    %14 = arith.subf %12, %13 : vector<8x1xf32>
    %c0_3 = arith.constant 0 : index
    %c0_4 = arith.constant 0 : index
    %15 = vector.load %arg3[%c0_3, %c0_4] : memref<1x1xf32, #tpu.memory_space<vmem>>, vector<1x1xf32>
    %16 = vector.shape_cast %14 : vector<8x1xf32> to vector<1x8x1xf32>
    %cst_5 = arith.constant dense<0.000000e+00> : vector<1xf32>
    %17 = vector.multi_reduction <add>, %16, %cst_5 [1, 2] : vector<1x8x1xf32> to vector<1xf32>
    %18 = vector.shape_cast %17 : vector<1xf32> to vector<1x1x1xf32>
    %19 = vector.extract %18[0, 0, 0] : f32 from vector<1x1x1xf32>
    %20 = vector.broadcast %19 : f32 to vector<1x1xf32>
    %21 = arith.addf %15, %20 : vector<1x1xf32>
    %c0_6 = arith.constant 0 : index
    %c0_7 = arith.constant 0 : index
    %22 = vector.load %arg3[%c0_6, %c0_7] : memref<1x1xf32, #tpu.memory_space<vmem>>, vector<1x1xf32>
    tpu.vector_store %arg3[%c0_6, %c0_7], %21 {strides = array<i32>} : memref<1x1xf32, #tpu.memory_space<vmem>>, vector<1x1xf32>,
    %c0_i32_8 = arith.constant 0 : i32
    %23 = arith.cmpi eq, %arg0, %c0_i32_8 : i32
    %24 = arith.extui %23 : i1 to i32
    %c0_i32_9 = arith.constant 0 : i32
    %25 = arith.cmpi ne, %24, %c0_i32_9 : i32
    scf.if %25 {
      %c0_10 = arith.constant 0 : index
      %c0_11 = arith.constant 0 : index
      %26 = vector.load %arg3[%c0_10, %c0_11] : memref<1x1xf32, #tpu.memory_space<vmem>>, vector<1x1xf32>
      %cst_12 = arith.constant 1.250000e-01 : f32
      %27 = vector.broadcast %cst_12 : f32 to vector<1x1xf32>
      %28 = arith.mulf %26, %27 : vector<1x1xf32>
      %c0_13 = arith.constant 0 : index
      %c0_14 = arith.constant 0 : index
      %29 = vector.load %arg2[%c0_13, %c0_14] : memref<1x1xf32, #tpu.memory_space<vmem>>, vector<1x1xf32>
      tpu.vector_store %arg2[%c0_13, %c0_14], %28 {strides = array<i32>} : memref<1x1xf32, #tpu.memory_space<vmem>>, vector<1x1xf32>,
    } else {
    }
    return
  }
  func.func @transform_0(%arg0: i32) -> (i32, i32) {
    %c0_i32 = arith.constant 0 : i32
    %c0_i32_0 = arith.constant 0 : i32
    return %arg0, %c0_i32 : i32, i32
  }
  func.func @transform_1(%arg0: i32) -> (i32, i32) {
    %c0_i32 = arith.constant 0 : i32
    %c0_i32_0 = arith.constant 0 : i32
    %c0_i32_1 = arith.constant 0 : i32
    return %c0_i32, %c0_i32_0 : i32, i32
  }
}

</mosaic_0001>

<llo_original>
// kernel: tpu_custom_call.1
$region0: #{tpu_custom_call.1}
  #allocation0 [shape = 'u32[]', space=smem, size = 0x4, offset = 0x4, fixed_abs, tag = 'smem constant byte address 0x4 - core index']
  #allocation1 [shape = 'u32[144,128]{1,0:T(1,128)}', space=vmem, size = 0x12000, scoped, tag = 'internal scratch']
  #allocation2 [shape = 'f32[1,1]{1,0:T(1,128)}', space=vmem, size = 0x200, scoped, tag = 'scratch operand']
  %s0 = inlined_call_operand.hbm [shape: f32[8,32], index: 0, kind: input, shape index: {}]
  %s1 = inlined_call_operand.hbm [shape: f32[1,1], index: 1, kind: output, shape index: {}]
  %s2 = sld [smem:[#allocation0]]
  $region26: #{tpu_custom_call.1} parent=0
    _
  %s4 = ssub.s32 1, %s2
  %s5 = scalar_select 0, %s4, %s2
  $region1: #{tpu_custom_call.1} parent=0
    #allocation3 [shape = 'u8[4096]{0}', space=vmem, size = 0x1000, scoped, tag = 'input window, operand 0, single buffered']
    #allocation4 [shape = 's32[1]{0}', space=sflag, size = 0x4, scoped, tag = 'scoped memory for tpu_custom_call.1']
    #allocation5 [shape = 's32[1]{0}', space=sflag, size = 0x4, scoped, tag = 'scoped memory for tpu_custom_call.1']
    #allocation6 [shape = 'u8[512]{0}', space=vmem, size = 0x400, scoped, tag = 'output window, operand 0, single buffered']
    %6 = vsyncpa [#allocation4], 0
    %7 = vsyncpa [#allocation5], 0
    // Predicated region
    $region2: #{tpu_custom_call.1} parent=1 // pred_check
      _
    $region3: #{tpu_custom_call.1} parent=1 // pred_check_branch
      %9 = sbr.rel (0) target = $region5
    $region4: #{tpu_custom_call.1} parent=1 // pred_region
      %s11 = ssub.s32 128, 128
      %12 = vsyncadd [#allocation4], %s11
      %s14 = sshll.u32 [#allocation3], 4
      %s15 = int_to_ptr.vmem [resolvable:$true] %s14
      %17 = dma.hbm_to_vmem [thread:$0]  %s0, 128, %s15, [#allocation4]
    $region5: #{tpu_custom_call.1} parent=1 // pred_fallthru
      _
    // Predicated region
    $region6: #{tpu_custom_call.1} parent=1 // pred_check
      _
    $region7: #{tpu_custom_call.1} parent=1 // pred_check_branch
      %19 = sbr.rel (0) target = $region9
    $region8: #{tpu_custom_call.1} parent=1 // pred_region
      %20 = dma.done [#allocation4], 128
    $region9: #{tpu_custom_call.1} parent=1 // pred_fallthru
      _
    %p21 = scmp.eq.s32.totalorder 0, 0
    // Predicated region
    $region10: #{tpu_custom_call.1} parent=1 // pred_check
      %p22 = pneg %p21
    $region11: #{tpu_custom_call.1} parent=1 // pred_check_branch
      %24 = sbr.rel (%p22) target = $region13
    $region12: #{tpu_custom_call.1} parent=1 // pred_region
      %vm25 = vcmask 0
      %26 = vst.msk [vmem:[#allocation2] sm:$0x1] %vm25, 0.0
    $region13: #{tpu_custom_call.1} parent=1 // pred_fallthru
      _
    %v27 = vld [vmem:[#allocation3] sm:$0xff]
    %vm28 = vcmask 261120
    %v29 = vsel %vm28, %v27, -inf
    %30 = vmax.xlane.f32.xlu0 %v29
    %v31 = vpop.xlane.xlu0 %30
    %v32 = vsub.f32 %v27, %v31
    %v33 = vmul.f32 %v32, 1.442695
    %v34 = vpow.pop %v33
    %v35 = vsel %vm28, %v34, 0.0
    %36 = vadd.xlane.f32.xlu0 %v35
    %v37 = vpop.xlane.xlu0 %36
    %v38 = vlog2.pop %v37
    %v39 = vmul.f32 %v38, 0.6931472
    %v40 = vadd.f32 %v39, %v31
    %v41 = vsub.f32 %v40, %v27
    %v42 = vld [vmem:[#allocation2] sm:$0x1]
    %vm43 = vcmask 7168
    %v44 = vsel %vm43, %v41, 0.0
    %45 = vadd.xlane.f32.xlu0 %v44
    %v46 = vpop.xlane.xlu0 %45
    %v47 = vrot.slane %v46, 4
    %v48 = vadd.f32 %v46, %v47
    %v49 = vrot.slane %v48, 2
    %v50 = vadd.f32 %v48, %v49
    %v51 = vrot.slane %v50, 1
    %v52 = vadd.f32 %v50, %v51
    %s53 = vtos %v52
    %v54 = vstv %s53
    %v55 = vadd.f32 %v42, %v54
    %vm56 = vcmask 0
    %57 = vst.msk [vmem:[#allocation2] sm:$0x1] %vm56, %v55
    // Predicated region
    $region14: #{tpu_custom_call.1} parent=1 // pred_check
      %p58 = pneg %p21
    $region15: #{tpu_custom_call.1} parent=1 // pred_check_branch
      %60 = sbr.rel (%p58) target = $region17
    $region16: #{tpu_custom_call.1} parent=1 // pred_region
      %v61 = vld [vmem:[#allocation2] sm:$0x1]
      %v62 = vmul.f32 %v61, 0.125
      %63 = vst.msk [vmem:[#allocation6] sm:$0x1] %vm56, %v62
    $region17: #{tpu_custom_call.1} parent=1 // pred_fallthru
      _
    // Predicated region
    $region18: #{tpu_custom_call.1} parent=1 // pred_check
      _
    $region19: #{tpu_custom_call.1} parent=1 // pred_check_branch
      %65 = sbr.rel (0) target = $region21
    $region20: #{tpu_custom_call.1} parent=1 // pred_region
      %s67 = ssub.s32 16, 16
      %68 = vsyncadd [#allocation5], %s67
      %s70 = sshll.u32 [#allocation6], 4
      %s71 = int_to_ptr.vmem [resolvable:$true] %s70
      %73 = dma.vmem_to_hbm [thread:$0]  %s71, 16, %s1, [#allocation5]
    $region21: #{tpu_custom_call.1} parent=1 // pred_fallthru
      _
    // Predicated region
    $region22: #{tpu_custom_call.1} parent=1 // pred_check
      _
    $region23: #{tpu_custom_call.1} parent=1 // pred_check_branch
      %75 = sbr.rel (0) target = $region25
    $region24: #{tpu_custom_call.1} parent=1 // pred_region
      %76 = dma.done [#allocation5], 16
    $region25: #{tpu_custom_call.1} parent=1 // pred_fallthru
      _
    %77 = vsyncpa [#allocation4], 1
    %78 = vsyncpa [#allocation5], 1

</llo_original>
